<compile_context>
chip_gen: v7x
topology: tpu7x:2x2x1
jax: 0.10.0
libtpu: 0.0.40
codegen_flags: <defaults>
</compile_context>

<pallas_src>
import jax
import jax.numpy as jnp
from jax.experimental import pallas as pl
from jax.experimental.pallas import tpu as pltpu


def _round_up(x: int, m: int) -> int:
    return ((x + m - 1) // m) * m


def _choose_tile_m(m: int, cap: int, row_align: int) -> int:
    """Pick the row-tile size.

    Prefers (a) one full tile when M is tiny, (b) the largest row_align-multiple
    <= cap that divides M (avoids padding M and the post-kernel slice),
    (c) otherwise an aligned cap (caller pads M). When M is large enough the
    tile is capped so the 1-D grid has length >= 2, keeping both v7x
    TensorCores busy under dimension_semantics=("parallel",).
    """
    cap = max(row_align, min(cap, m))
    if m <= cap:
        if m < 4 * row_align:                      # tiny problem: one tile
            return m
        cap = _round_up((m + 1) // 2, row_align)   # split across 2 cores
    t = (cap // row_align) * row_align
    while t >= row_align:
        if m % t == 0:
            return t
        t -= row_align
    return (cap // row_align) * row_align          # no aligned divisor: pad M


def _patch_embed_kernel(x_ref, w_ref, b_ref, o_ref):
    # x_ref: (TM, K) patch tile, w_ref: (K, E) resident weight,
    # b_ref: (1, E) f32 bias, o_ref: (TM, E).
    acc = jnp.dot(x_ref[...], w_ref[...], preferred_element_type=jnp.float32)
    o_ref[...] = (acc + b_ref[...]).astype(o_ref.dtype)


def patch_embedding(x, conv_weight, conv_bias, patch_size, *,
                    compute_dtype=jnp.bfloat16, tile_m=None,
                    vmem_budget_bytes=24 * 1024 * 1024):
    """x: (B, C, H, W); conv_weight: (E, C, P, P); conv_bias: (E,) -> (B, N, E).

    compute_dtype: dtype of the MXU matmul inputs (accumulation is always f32).
                   Default bf16 (2-4x MXU rate, half the patch-stream bytes);
                   pass None / jnp.float32 for bit-exact f32 math.
    tile_m:        optional cap on rows of the (B*N, K) patch matrix per grid
                   step; default is auto-sized from vmem_budget_bytes.
    vmem_budget_bytes: VMEM budget used to size the row tile. 24 MiB is safe on
                   v7x (64 MiB physical, 2 cores); raise (e.g. 64 MiB) on
                   v5e/v6e (128 MiB VMEM) for slightly larger tiles.
    """
    B, C, H, W = x.shape
    E = conv_weight.shape[0]
    P = patch_size
    assert H % P == 0 and W % P == 0, "image dims must be divisible by patch size"
    Hp, Wp = H // P, W // P
    N = Hp * Wp
    K = C * P * P
    M = B * N
    out_dtype = x.dtype
    in_dtype = jnp.dtype(compute_dtype) if compute_dtype is not None else jnp.dtype(x.dtype)

    # --- glue (plain JAX): patchify input, flatten conv weight ----------------
    # (B, C, Hp, P, Wp, P) -> (B, Hp, Wp, C, P, P) -> (B*N, C*P*P); column order
    # (c, kh, kw) matches conv_weight.reshape(E, C*P*P).
    patches = x.reshape(B, C, Hp, P, Wp, P)
    patches = jnp.transpose(patches, (0, 2, 4, 1, 3, 5)).reshape(M, K)
    w_flat = jnp.transpose(conv_weight.reshape(E, K), (1, 0))   # (K, E)
    if patches.dtype != in_dtype:
        patches = patches.astype(in_dtype)
    if w_flat.dtype != in_dtype:
        w_flat = w_flat.astype(in_dtype)
    bias = conv_bias.astype(jnp.float32).reshape(1, E)

    in_item = in_dtype.itemsize
    out_item = jnp.dtype(out_dtype).itemsize

    # --- row-tile size from an explicit VMEM budget ----------------------------
    min_item = min(in_item, out_item)
    row_align = 8 if min_item >= 4 else (16 if min_item == 2 else 32)
    fixed_vmem = K * E * in_item + E * 4                 # resident weight + bias (single-buffered)
    per_row = 2 * (K * in_item + E * out_item)           # double-buffered patch + out tiles
    cap = max(row_align, (vmem_budget_bytes - fixed_vmem) // per_row)
    if tile_m is not None:
        cap = min(cap, tile_m)
    cap = min(cap, 2048)
    tm = _choose_tile_m(M, int(cap), row_align)

    Mp = _round_up(M, tm)
    if Mp != M:  # only when no aligned divisor of M exists; zero rows sliced off below
        patches = jnp.pad(patches, ((0, Mp - M), (0, 0)))

    usage = 2 * tm * (K * in_item + E * out_item) + fixed_vmem
    vmem_limit = int(min(100 * 1024 * 1024,
                         max(32 * 1024 * 1024, usage + 16 * 1024 * 1024)))

    cost = pl.CostEstimate(
        flops=2 * Mp * K * E,
        transcendentals=0,
        bytes_accessed=(Mp * K * in_item + K * E * in_item + E * 4
                        + Mp * E * out_item),
    )

    # --- hot path in Pallas: (Mp, K) @ (K, E) + bias, tiled over rows ----------
    out = pl.pallas_call(
        _patch_embed_kernel,
        out_shape=jax.ShapeDtypeStruct((Mp, E), out_dtype),
        grid_spec=pl.GridSpec(
            grid=(Mp // tm,),
            in_specs=[
                # streamed patch tiles (double-buffered by default)
                pl.BlockSpec((tm, K), lambda i: (i, 0)),
                # resident weight: constant index -> single buffer is enough
                pl.BlockSpec((K, E), lambda i: (0, 0),
                             pipeline_mode=pl.Buffered(1)),
                # resident bias
                pl.BlockSpec((1, E), lambda i: (0, 0),
                             pipeline_mode=pl.Buffered(1)),
            ],
            out_specs=pl.BlockSpec((tm, E), lambda i: (i, 0)),
        ),
        compiler_params=pltpu.CompilerParams(
            dimension_semantics=("parallel",),
            allow_input_fusion=[True, False, False],
            vmem_limit_bytes=vmem_limit,
        ),
        cost_estimate=cost,
    )(patches, w_flat, bias)

    if Mp != M:
        out = out[:M]
    return out.reshape(B, N, E)


if __name__ == "__main__":
    # Small shapes consistent with the module: B=2, C=3 (module default), H=W=16,
    # patch=8, embedding=32.
    B, C, H, W = 2, 3, 16, 16
    P = 8
    E = 32

    key = jax.random.PRNGKey(0)
    kx, kw, kb = jax.random.split(key, 3)

    x = jax.random.normal(kx, (B, C, H, W), dtype=jnp.float32)
    conv_weight = jax.random.normal(kw, (E, C, P, P), dtype=jnp.float32) * 0.02
    conv_bias = jax.random.normal(kb, (E,), dtype=jnp.float32) * 0.02

    # Reference: same math as nn.Conv2d forward + flatten + permute.
    ref = jax.lax.conv_general_dilated(
        x, conv_weight, window_strides=(P, P), padding="VALID",
        dimension_numbers=("NCHW", "OIHW", "NCHW"),
    ) + conv_bias.reshape(1, E, 1, 1)
    ref = jnp.transpose(ref.reshape(B, E, -1), (0, 2, 1))

    # Exact-math path (f32 MXU inputs) — tight tolerance.
    fn_f32 = jax.jit(lambda a, w, b: patch_embedding(a, w, b, P, compute_dtype=None))
    out_f32 = jax.block_until_ready(fn_f32(x, conv_weight, conv_bias))
    assert out_f32.shape == (B, (H // P) * (W // P), E)
    assert jnp.allclose(out_f32, ref, atol=1e-4, rtol=1e-4)

    # Default fast path (bf16 MXU inputs, f32 accumulation) — expected small
    # precision change, hence the looser tolerance.
    fn_bf16 = jax.jit(lambda a, w, b: patch_embedding(a, w, b, P))
    out_bf16 = jax.block_until_ready(fn_bf16(x, conv_weight, conv_bias))
    assert out_bf16.shape == (B, (H // P) * (W // P), E)
    assert jnp.allclose(out_bf16, ref, atol=2e-2, rtol=2e-2)

    print("KERNEL_OK")
</pallas_src>

<mosaic_0001>
module attributes {stable_mosaic.version = 11 : i64} {
  func.func @_patch_embed_kernel(%arg0: i32, %arg1: memref<8x192xf32, #tpu.memory_space<vmem>>, %arg2: memref<192x32xf32, #tpu.memory_space<vmem>>, %arg3: memref<1x32xf32, #tpu.memory_space<vmem>>, %arg4: memref<8x32xf32, #tpu.memory_space<vmem>>) attributes {dimension_semantics = [#tpu.dimension_semantics<parallel>], iteration_bounds = array<i64: 1>, scalar_prefetch = 0 : i64, scratch_operands = 0 : i64, tpu.core_type = #tpu.core_type<tc>, window_params = [{transform_indices = @transform_0, window_bounds = array<i64: 8, 192>}, {pipeline_mode = #tpu.pipeline_mode<synchronous>, transform_indices = @transform_1, window_bounds = array<i64: 192, 32>}, {pipeline_mode = #tpu.pipeline_mode<synchronous>, transform_indices = @transform_2, window_bounds = array<i64: 1, 32>}, {transform_indices = @transform_3, window_bounds = array<i64: 8, 32>}]} {
    %c0 = arith.constant 0 : index
    %c0_0 = arith.constant 0 : index
    %0 = vector.load %arg1[%c0, %c0_0] : memref<8x192xf32, #tpu.memory_space<vmem>>, vector<8x192xf32>
    %c0_1 = arith.constant 0 : index
    %c0_2 = arith.constant 0 : index
    %1 = vector.load %arg2[%c0_1, %c0_2] : memref<192x32xf32, #tpu.memory_space<vmem>>, vector<192x32xf32>
    %cst = arith.constant dense<0.000000e+00> : vector<8x32xf32>
    %2 = tpu.matmul %0, %1, %cst {dimension_numbers = #tpu.dot_dimension_numbers<[1], [0], [0], [1], [0, 0, 1, 1], [], []>} : vector<8x192xf32>, vector<192x32xf32>, vector<8x32xf32> -> vector<8x32xf32>
    %c0_3 = arith.constant 0 : index
    %c0_4 = arith.constant 0 : index
    %3 = vector.load %arg3[%c0_3, %c0_4] : memref<1x32xf32, #tpu.memory_space<vmem>>, vector<1x32xf32>
    %4 = vector.broadcast %3 : vector<1x32xf32> to vector<8x32xf32>
    %5 = arith.addf %2, %4 : vector<8x32xf32>
    %c0_5 = arith.constant 0 : index
    %c0_6 = arith.constant 0 : index
    %6 = vector.load %arg4[%c0_5, %c0_6] : memref<8x32xf32, #tpu.memory_space<vmem>>, vector<8x32xf32>
    tpu.vector_store %arg4[%c0_5, %c0_6], %5 {strides = array<i32>} : memref<8x32xf32, #tpu.memory_space<vmem>>, vector<8x32xf32>,
    return
  }
  func.func @transform_0(%arg0: i32) -> (i32, i32) {
    %c0_i32 = arith.constant 0 : i32
    %c0_i32_0 = arith.constant 0 : i32
    return %arg0, %c0_i32 : i32, i32
  }
  func.func @transform_1(%arg0: i32) -> (i32, i32) {
    %c0_i32 = arith.constant 0 : i32
    %c0_i32_0 = arith.constant 0 : i32
    %c0_i32_1 = arith.constant 0 : i32
    return %c0_i32, %c0_i32_0 : i32, i32
  }
  func.func @transform_2(%arg0: i32) -> (i32, i32) {
    %c0_i32 = arith.constant 0 : i32
    %c0_i32_0 = arith.constant 0 : i32
    %c0_i32_1 = arith.constant 0 : i32
    return %c0_i32, %c0_i32_0 : i32, i32
  }
  func.func @transform_3(%arg0: i32) -> (i32, i32) {
    %c0_i32 = arith.constant 0 : i32
    %c0_i32_0 = arith.constant 0 : i32
    return %arg0, %c0_i32 : i32, i32
  }
}

</mosaic_0001>

<llo_original>
// kernel: _lambda_.1
$region0: #{_lambda_.1}
  #allocation0 [shape = 'u32[]', space=smem, size = 0x4, offset = 0x4, fixed_abs, tag = 'smem constant byte address 0x4 - core index']
  #allocation1 [shape = 'u32[144,128]{1,0:T(1,128)}', space=vmem, size = 0x12000, scoped, tag = 'internal scratch']
  %s0 = inlined_call_operand.vmem [shape: f32[8,192], index: 0, kind: input, shape index: {}]
  %s1 = inlined_call_operand.vmem [shape: f32[192,32], index: 1, kind: input, shape index: {}]
  %s2 = inlined_call_operand.vmem [shape: f32[1,32], index: 2, kind: input, shape index: {}]
  %s3 = inlined_call_operand.hbm [shape: f32[8,32], index: 3, kind: output, shape index: {}]
  %s4 = sld [smem:[#allocation0]]
  $region22: #{_lambda_.1} parent=0
    _
  %s6 = ssub.s32 1, %s4
  %s7 = scalar_select 0, %s6, %s4
  $region1: #{_lambda_.1} parent=0
    #allocation2 [shape = 'u8[4096]{0}', space=vmem, size = 0x1000, scoped, tag = 'output window, operand 0, single buffered']
    #allocation3 [shape = 's32[1]{0}', space=sflag, size = 0x4, scoped, tag = 'scoped memory for _lambda_.1']
    %8 = vsyncpa [#allocation3], 0
    // Predicated region
    $region2: #{_lambda_.1} parent=1 // pred_check
      _
    $region3: #{_lambda_.1} parent=1 // pred_check_branch
      %10 = sbr.rel (0) target = $region5
    $region4: #{_lambda_.1} parent=1 // pred_region
      _
    $region5: #{_lambda_.1} parent=1 // pred_fallthru
      _
    // Predicated region
    $region6: #{_lambda_.1} parent=1 // pred_check
      _
    $region7: #{_lambda_.1} parent=1 // pred_check_branch
      %12 = sbr.rel (0) target = $region9
    $region8: #{_lambda_.1} parent=1 // pred_region
      _
    $region9: #{_lambda_.1} parent=1 // pred_fallthru
      _
    // Predicated region
    $region10: #{_lambda_.1} parent=1 // pred_check
      _
    $region11: #{_lambda_.1} parent=1 // pred_check_branch
      %14 = sbr.rel (0) target = $region13
    $region12: #{_lambda_.1} parent=1 // pred_region
      _
    $region13: #{_lambda_.1} parent=1 // pred_fallthru
      _
    %v15 = vld [vmem:[%s0] sm:$0xff]
    %v16 = vld [vmem:[%s0 + $0x8] sm:$0xff]
    %v17 = vld [vmem:[%s1] sm:$0xff]
    %v18 = vld [vmem:[%s1 + $0x8] sm:$0xff]
    %v19 = vld [vmem:[%s1 + $0x10] sm:$0xff]
    %v20 = vld [vmem:[%s1 + $0x18] sm:$0xff]
    %v21 = vld [vmem:[%s1 + $0x20] sm:$0xff]
    %v22 = vld [vmem:[%s1 + $0x28] sm:$0xff]
    %v23 = vld [vmem:[%s1 + $0x30] sm:$0xff]
    %v24 = vld [vmem:[%s1 + $0x38] sm:$0xff]
    %v25 = vld [vmem:[%s1 + $0x40] sm:$0xff]
    %v26 = vld [vmem:[%s1 + $0x48] sm:$0xff]
    %v27 = vld [vmem:[%s1 + $0x50] sm:$0xff]
    %v28 = vld [vmem:[%s1 + $0x58] sm:$0xff]
    %v29 = vld [vmem:[%s1 + $0x60] sm:$0xff]
    %v30 = vld [vmem:[%s1 + $0x68] sm:$0xff]
    %v31 = vld [vmem:[%s1 + $0x70] sm:$0xff]
    %v32 = vld [vmem:[%s1 + $0x78] sm:$0xff]
    %v33 = vld [vmem:[%s1 + $0x80] sm:$0xff]
    %v34 = vld [vmem:[%s1 + $0x88] sm:$0xff]
    %v35 = vld [vmem:[%s1 + $0x90] sm:$0xff]
    %v36 = vld [vmem:[%s1 + $0x98] sm:$0xff]
    %v37 = vld [vmem:[%s1 + $0xa0] sm:$0xff]
    %v38 = vld [vmem:[%s1 + $0xa8] sm:$0xff]
    %v39 = vld [vmem:[%s1 + $0xb0] sm:$0xff]
    %v40 = vld [vmem:[%s1 + $0xb8] sm:$0xff]
    %v41 = vld [vmem:[%s2] sm:$0x1]
    %v43 = vlaneseq
    %v44 = vshrl.u32 %v43, 7
    %v45 = vsub.s32 0, %v44
    %v46 = vrot.slane %v41, %v45
    %vm48 = vcmask 523264
    %v50 = vsel %vm48, %v16, 0
    %52 = vmatprep.subr.mxu0 0.0
    %53 = vmatpush1.msra.mxu0 %v17
    %54 = vmatprep.subr.mxu0 0.0
    %55 = vmatpush1.msra.mxu0 %v18
    %56 = vmatprep.subr.mxu0 0.0
    %57 = vmatpush1.msra.mxu0 %v19
    %58 = vmatprep.subr.mxu0 0.0
    %59 = vmatpush1.msra.mxu0 %v20
    %60 = vmatprep.subr.mxu0 0.0
    %61 = vmatpush1.msra.mxu0 %v21
    %62 = vmatprep.subr.mxu0 0.0
    %63 = vmatpush1.msra.mxu0 %v22
    %64 = vmatprep.subr.mxu0 0.0
    %65 = vmatpush1.msra.mxu0 %v23
    %66 = vmatprep.subr.mxu0 0.0
    %67 = vmatpush1.msra.mxu0 %v24
    %68 = vmatprep.subr.mxu0 0.0
    %69 = vmatpush1.msra.mxu0 %v25
    %70 = vmatprep.subr.mxu0 0.0
    %71 = vmatpush1.msra.mxu0 %v26
    %72 = vmatprep.subr.mxu0 0.0
    %73 = vmatpush1.msra.mxu0 %v27
    %74 = vmatprep.subr.mxu0 0.0
    %75 = vmatpush1.msra.mxu0 %v28
    %76 = vmatprep.subr.mxu0 0.0
    %77 = vmatpush1.msra.mxu0 %v29
    %78 = vmatprep.subr.mxu0 0.0
    %79 = vmatpush1.msra.mxu0 %v30
    %80 = vmatprep.subr.mxu0 0.0
    %81 = vmatpush1.msra.mxu0 %v31
    %82 = vmatprep.subr.mxu0 0.0
    %83 = vmatpush1.msra.mxu0 %v32
    %84 = vmatprep.subr.mxu0 0.0
    %85 = vmatpush1.msra.mxu0 %v33
    %86 = vmatprep.subr.mxu0 0.0
    %87 = vmatpush1.msra.mxu0 %v34
    %88 = vmatprep.subr.mxu0 0.0
    %89 = vmatpush1.msra.mxu0 %v35
    %90 = vmatprep.subr.mxu0 0.0
    %91 = vmatpush1.msra.mxu0 %v36
    %92 = vmatprep.subr.mxu0 0.0
    %93 = vmatpush1.msra.mxu0 %v37
    %94 = vmatprep.subr.mxu0 0.0
    %95 = vmatpush1.msra.mxu0 %v38
    %96 = vmatprep.subr.mxu0 0.0
    %97 = vmatpush1.msra.mxu0 %v39
    %98 = vmatprep.subr.mxu0 0.0
    %99 = vmatpush1.msra.mxu0 %v40
    %100 = vmatprep.subr.mxu0 0.0
    %101 = vmatpush1.msra.mxu0 0.0
    %102 = vmatprep.subr.mxu0 0.0
    %103 = vmatpush1.msra.mxu0 0.0
    %104 = vmatprep.subr.mxu0 0.0
    %105 = vmatpush1.msra.mxu0 0.0
    %106 = vmatprep.subr.mxu0 0.0
    %107 = vmatpush1.msra.mxu0 0.0
    %108 = vmatprep.subr.mxu0 0.0
    %109 = vmatpush1.msra.mxu0 0.0
    %110 = vmatprep.subr.mxu0 0.0
    %111 = vmatpush1.msra.mxu0 0.0
    %112 = vmatprep.subr.mxu0 0.0
    %113 = vmatpush1.msra.mxu0 0.0
    %114 = vmatprep.subr.mxu0 0.0
    %115 = vmatpush1.msra.mxu0 0.0
    %116 = vmatprep.mubr.f32.mxu0 %v50
    %117 = vmatmul.mubr.f32.gmra.mrb[0].mxu0 %v15
    %v118 = vpop.f32.mrb[0].mxu0
    %v119 = vadd.f32 %v46, %v118
    %v120 = vpop.f32.mrb[0].mxu0
    %121 = vdwg.mxu0
    %vm122 = vcmask 261120
    %123 = vst.msk [vmem:[#allocation2] sm:$0xff] %vm122, %v119
    // Predicated region
    $region14: #{_lambda_.1} parent=1 // pred_check
      _
    $region15: #{_lambda_.1} parent=1 // pred_check_branch
      %125 = sbr.rel (0) target = $region17
    $region16: #{_lambda_.1} parent=1 // pred_region
      %s127 = ssub.s32 128, 128
      %128 = vsyncadd [#allocation3], %s127
      %s130 = sshll.u32 [#allocation2], 4
      %s131 = int_to_ptr.vmem [resolvable:$true] %s130
      %133 = dma.vmem_to_hbm [thread:$0]  %s131, 128, %s3, [#allocation3]
    $region17: #{_lambda_.1} parent=1 // pred_fallthru
      _
    // Predicated region
    $region18: #{_lambda_.1} parent=1 // pred_check
      _
    $region19: #{_lambda_.1} parent=1 // pred_check_branch
      %135 = sbr.rel (0) target = $region21
    $region20: #{_lambda_.1} parent=1 // pred_region
      %136 = dma.done [#allocation3], 128
    $region21: #{_lambda_.1} parent=1 // pred_fallthru
      _
    %137 = vsyncpa [#allocation3], 1

</llo_original>
